<compile_context>
chip_gen: v5e
topology: v5e:2x2
jax: 0.10.0
libtpu: 0.0.40
codegen_flags: <defaults>
</compile_context>

<pallas_src>
import functools

import jax
import jax.numpy as jnp
from jax.experimental import pallas as pl
from jax.experimental.pallas import tpu as pltpu


# ---------------------------------------------------------------------------
# Helpers
# ---------------------------------------------------------------------------
def _pick_tile(dim, candidates):
    """Largest candidate tile that evenly divides `dim`, else the full dim."""
    for c in candidates:
        if dim >= c and dim % c == 0:
            return c
    return dim


def _head_group(n_heads, head_dim):
    """Heads processed together per attention grid step.

    Chosen so the attention block lane width G*head_dim is a multiple of 128
    (lane-dense loads/stores) or covers all heads (== embed_dim, always legal).
    """
    if head_dim % 128 == 0:
        return 1
    for g in range(1, n_heads + 1):
        if n_heads % g == 0 and (g * head_dim) % 128 == 0:
            return g
    return n_heads


# ---------------------------------------------------------------------------
# Kernel 1: tiled linear  y = x @ W + b   (W stored as (in, out), bf16)
#   grid = (M/TM, OUT/TN, K/TK), f32 accumulator scratch, bias added once.
# ---------------------------------------------------------------------------
_LINEAR_VMEM_BUDGET = 20 * 1024 * 1024     # per-step working set target
_LINEAR_VMEM_LIMIT = 48 * 1024 * 1024      # < v7x 64 MiB physical VMEM


def _linear_kernel(x_ref, w_ref, b_ref, o_ref, acc_ref):
    @pl.when(pl.program_id(2) == 0)
    def _():
        acc_ref[...] = jnp.zeros_like(acc_ref)

    acc_ref[...] += jnp.dot(x_ref[...], w_ref[...],
                            preferred_element_type=jnp.float32)

    @pl.when(pl.program_id(2) == pl.num_programs(2) - 1)
    def _():
        o_ref[...] = (acc_ref[...] + b_ref[...]).astype(o_ref.dtype)


def _linear_tiles(M, K, OUT, out_bytes):
    TM = _pick_tile(M, (512, 256, 128))
    TN = _pick_tile(OUT, (512, 256, 128))
    TK = _pick_tile(K, (2048, 1024, 512, 256, 128))

    def need(tm, tn, tk):
        # double-buffered bf16 inputs + double-buffered output + f32 acc + bias
        return (2 * (tm * tk + tk * tn) * 2 + 2 * tm * tn * out_bytes
                + tm * tn * 4 + 2 * tn * 4)

    while need(TM, TN, TK) > _LINEAR_VMEM_BUDGET and TK > 128 and K % (TK // 2) == 0:
        TK //= 2
    while need(TM, TN, TK) > _LINEAR_VMEM_BUDGET and TN > 128 and OUT % (TN // 2) == 0:
        TN //= 2
    while need(TM, TN, TK) > _LINEAR_VMEM_BUDGET and TM > 128 and M % (TM // 2) == 0:
        TM //= 2
    return TM, TN, TK


def linear(x2d, w_t, b_row, out_dtype=jnp.bfloat16):
    """x2d: (M, K) bf16, w_t: (K, OUT) bf16, b_row: (1, OUT) f32 -> (M, OUT)."""
    M, K = x2d.shape
    OUT = w_t.shape[1]
    TM, TN, TK = _linear_tiles(M, K, OUT, jnp.dtype(out_dtype).itemsize)
    grid = (M // TM, OUT // TN, K // TK)
    return pl.pallas_call(
        _linear_kernel,
        out_shape=jax.ShapeDtypeStruct((M, OUT), out_dtype),
        grid=grid,
        in_specs=[
            pl.BlockSpec((TM, TK), lambda i, j, k: (i, k)),
            pl.BlockSpec((TK, TN), lambda i, j, k: (k, j)),
            pl.BlockSpec((1, TN), lambda i, j, k: (0, j)),
        ],
        out_specs=pl.BlockSpec((TM, TN), lambda i, j, k: (i, j)),
        scratch_shapes=[pltpu.VMEM((TM, TN), jnp.float32)],
        compiler_params=pltpu.CompilerParams(
            dimension_semantics=("parallel", "parallel", "arbitrary"),
            vmem_limit_bytes=_LINEAR_VMEM_LIMIT),
    )(x2d, w_t, b_row)


# ---------------------------------------------------------------------------
# Kernel 2: flash attention, head-grouped, reading heads from 2D GEMM output
# ---------------------------------------------------------------------------
def _attn_kernel(*refs, G, D, TQ, TK, causal, has_mask, mask_per_head):
    if has_mask:
        q_ref, k_ref, v_ref, m_ref, o_ref, m_sc, l_sc, acc_sc = refs
    else:
        q_ref, k_ref, v_ref, o_ref, m_sc, l_sc, acc_sc = refs
        m_ref = None

    qi = pl.program_id(1)
    ki = pl.program_id(2)
    nk = pl.num_programs(2)

    @pl.when(ki == 0)
    def _():
        m_sc[...] = jnp.full_like(m_sc, -jnp.inf)
        l_sc[...] = jnp.zeros_like(l_sc)
        acc_sc[...] = jnp.zeros_like(acc_sc)

    def update(apply_causal):
        q = q_ref[...]                       # (TQ, G*D) bf16
        k = k_ref[...]                       # (TK, G*D) bf16
        v = v_ref[...]                       # (TK, G*D) bf16
        if has_mask:
            mall = m_ref[...]                # int8, compared directly (no f32 cast)
        if apply_causal:
            q_pos = qi * TQ + jax.lax.broadcasted_iota(jnp.int32, (TQ, TK), 0)
            k_pos = ki * TK + jax.lax.broadcasted_iota(jnp.int32, (TQ, TK), 1)
            cmask = k_pos > q_pos            # True -> masked out

        for h in range(G):                   # static per-head loop within the group
            sl = slice(h * D, (h + 1) * D)
            # scores = q_h @ k_h^T (contract D, no K transpose); Q already /scale
            s = jax.lax.dot_general(q[:, sl], k[:, sl],
                                    (((1,), (1,)), ((), ())),
                                    preferred_element_type=jnp.float32)
            if has_mask:
                mh = mall[h] if mask_per_head else mall
                s = jnp.where(mh == 0, jnp.float32(-1e20), s)
            if apply_causal:
                s = jnp.where(cmask, jnp.float32(-1e20), s)

            m_prev = m_sc[h]
            m_new = jnp.maximum(m_prev, jnp.max(s, axis=-1, keepdims=True))
            alpha = jnp.exp(m_prev - m_new)
            # TODO(synk): on v6e/v7x the exp could run on bf16 operands if the
            # EUP is the saturating slot; kept f32 for v5e compatibility.
            p = jnp.exp(s - m_new)
            l_sc[h] = alpha * l_sc[h] + jnp.sum(p, axis=-1, keepdims=True)
            acc_sc[h] = alpha * acc_sc[h] + jnp.dot(
                p.astype(v.dtype), v[:, sl], preferred_element_type=jnp.float32)
            m_sc[h] = m_new

    if causal:
        q_start = qi * TQ
        q_last = q_start + TQ - 1
        k_start = ki * TK
        k_last = k_start + TK - 1

        @pl.when(k_last <= q_start)                       # fully unmasked tile
        def _():
            update(apply_causal=False)

        @pl.when(jnp.logical_and(k_start <= q_last, k_last > q_start))  # diagonal
        def _():
            update(apply_causal=True)
        # fully-masked tiles (k_start > q_last) are skipped entirely
    else:
        update(apply_causal=False)

    # TODO(synk): nn.Dropout on the attention weights is identity at inference;
    # training-time dropout of `p` is not implemented here.

    @pl.when(ki == nk - 1)
    def _():
        outs = []
        for h in range(G):
            inv = pl.reciprocal(l_sc[h], approx=True)
            outs.append((acc_sc[h] * inv).astype(o_ref.dtype))
        o_ref[...] = outs[0] if G == 1 else jnp.concatenate(outs, axis=-1)


def flash_attention(q_arr, k_arr, v_arr, q_off, k_off, v_off, *,
                    N, H, G, D, Sq, Sk, mask4=None, causal=False):
    """q_arr: (N*Sq, >=E) bf16; k_arr/v_arr: (N*Sk, >=E) bf16.

    Heads are addressed as column blocks of width G*D starting at the given
    column-block offsets, so the same fused QKV/KV GEMM output can be passed
    directly (no slicing / transposing).  Returns (N*Sq, E) bf16 in the
    concatenated head layout.
    """
    E = H * D
    HG = H // G
    GD = G * D
    # Bigger tiles re-stream K/V fewer times; cap scores tile around 512x512.
    TQ = _pick_tile(Sq, (512, 256, 128))
    TK = _pick_tile(Sk, (512, 256, 128))
    nq, nk = Sq // TQ, Sk // TK
    grid = (N * HG, nq, nk)

    def q_map(bhg, qi, ki):
        return ((bhg // HG) * nq + qi, q_off + (bhg % HG))

    def k_map(bhg, qi, ki):
        return ((bhg // HG) * nk + ki, k_off + (bhg % HG))

    def v_map(bhg, qi, ki):
        return ((bhg // HG) * nk + ki, v_off + (bhg % HG))

    def o_map(bhg, qi, ki):
        return ((bhg // HG) * nq + qi, bhg % HG)

    in_specs = [pl.BlockSpec((TQ, GD), q_map),
                pl.BlockSpec((TK, GD), k_map),
                pl.BlockSpec((TK, GD), v_map)]
    args = [q_arr, k_arr, v_arr]

    has_mask = mask4 is not None
    mask_per_head = False
    if has_mask:
        Nm, Hm, Sqm, Skm = mask4.shape
        mask_per_head = Hm != 1
        TQm = TQ if Sqm == Sq else 1
        TKm = TK if Skm == Sk else 1

        def mask_map(bhg, qi, ki):
            return (bhg // HG if Nm != 1 else 0,
                    bhg % HG if Hm != 1 else 0,
                    qi if Sqm != 1 else 0,
                    ki if Skm != 1 else 0)

        mblock = (None, G if mask_per_head else None, TQm, TKm)
        in_specs.append(pl.BlockSpec(mblock, mask_map))
        args.append(mask4)

    kernel = functools.partial(_attn_kernel, G=G, D=D, TQ=TQ, TK=TK,
                               causal=causal, has_mask=has_mask,
                               mask_per_head=mask_per_head)
    scratch = [pltpu.VMEM((G, TQ, 1), jnp.float32),   # running max m
               pltpu.VMEM((G, TQ, 1), jnp.float32),   # running denom l
               pltpu.VMEM((G, TQ, D), jnp.float32)]   # running accumulator

    return pl.pallas_call(
        kernel,
        out_shape=jax.ShapeDtypeStruct((N * Sq, E), jnp.bfloat16),
        grid=grid,
        in_specs=in_specs,
        out_specs=pl.BlockSpec((TQ, GD), o_map),
        scratch_shapes=scratch,
        compiler_params=pltpu.CompilerParams(
            dimension_semantics=("parallel", "parallel", "arbitrary")),
    )(*args)


# ---------------------------------------------------------------------------
# Parameter preparation (done once): pre-transpose, fuse QKV/KV, fold 1/scale
# ---------------------------------------------------------------------------
def prepare_params(params, embed_dim):
    E = embed_dim
    scale = float(E) ** 0.5
    wq_t = params["wq"].T / scale               # fold 1/scale into Q projection
    bq = params["bq"] / scale
    w_qkv = jnp.concatenate(
        [wq_t, params["wk"].T, params["wv"].T], axis=1).astype(jnp.bfloat16)
    b_qkv = jnp.concatenate(
        [bq, params["bk"], params["bv"]]).reshape(1, -1).astype(jnp.float32)
    return {
        "w_qkv": w_qkv, "b_qkv": b_qkv,                       # (E, 3E) / (1, 3E)
        "w_q": w_qkv[:, :E], "b_q": b_qkv[:, :E],
        "w_k": w_qkv[:, E:2 * E], "b_k": b_qkv[:, E:2 * E],
        "w_v": w_qkv[:, 2 * E:], "b_v": b_qkv[:, 2 * E:],
        "w_kv": w_qkv[:, E:], "b_kv": b_qkv[:, E:],           # fused K|V (E, 2E)
        "w_out": params["wp"].T.astype(jnp.bfloat16),          # (E, E)
        "b_out": params["bp"].reshape(1, -1).astype(jnp.float32),
    }


# ---------------------------------------------------------------------------
# Full forward
# ---------------------------------------------------------------------------
def multi_head_attention(q, k, v, prepared, n_heads, mask=None, causal=False):
    N, Sq, E = q.shape
    Sk = k.shape[1]
    H = n_heads
    assert E % H == 0
    D = E // H
    G = _head_group(H, D)
    HG = H // G
    GD = G * D
    # Fast path: index heads directly out of the fused GEMM output (lane-dense).
    fused_head_index = (GD % 128 == 0)

    if q is k and k is v:
        # Self-attention: fused QKV projection, reads the activation once.
        qkv = linear(q.reshape(N * Sq, E).astype(jnp.bfloat16),
                     prepared["w_qkv"], prepared["b_qkv"], out_dtype=jnp.bfloat16)
        if fused_head_index:
            q_arr = k_arr = v_arr = qkv
            q_off, k_off, v_off = 0, HG, 2 * HG
        else:
            q_arr, k_arr, v_arr = qkv[:, :E], qkv[:, E:2 * E], qkv[:, 2 * E:]
            q_off = k_off = v_off = 0
    else:
        q_arr = linear(q.reshape(N * Sq, E).astype(jnp.bfloat16),
                       prepared["w_q"], prepared["b_q"], out_dtype=jnp.bfloat16)
        q_off = 0
        if k is v:
            # Cross-attention with shared K/V input: fused (E, 2E) projection.
            kv = linear(k.reshape(N * Sk, E).astype(jnp.bfloat16),
                        prepared["w_kv"], prepared["b_kv"], out_dtype=jnp.bfloat16)
            if fused_head_index:
                k_arr = v_arr = kv
                k_off, v_off = 0, HG
            else:
                k_arr, v_arr = kv[:, :E], kv[:, E:]
                k_off = v_off = 0
        else:
            k_arr = linear(k.reshape(N * Sk, E).astype(jnp.bfloat16),
                           prepared["w_k"], prepared["b_k"], out_dtype=jnp.bfloat16)
            v_arr = linear(v.reshape(N * Sk, E).astype(jnp.bfloat16),
                           prepared["w_v"], prepared["b_v"], out_dtype=jnp.bfloat16)
            k_off = v_off = 0

    mask4 = None
    if causal:
        assert mask is None, "pass either causal=True or an explicit mask"
        assert Sq == Sk, "causal=True assumes equal query/key lengths"
    elif mask is not None:
        m = jnp.asarray(mask)
        m = m.reshape((1,) * (4 - m.ndim) + m.shape)
        for md, fd in zip(m.shape, (N, H, Sq, Sk)):
            assert md in (1, fd), f"mask shape {m.shape} not broadcastable"
        mask4 = m.astype(jnp.int8)     # compact; BlockSpec broadcasts N/H/Sq/Sk

    ctx = flash_attention(q_arr, k_arr, v_arr, q_off, k_off, v_off,
                          N=N, H=H, G=G, D=D, Sq=Sq, Sk=Sk,
                          mask4=mask4, causal=causal)     # (N*Sq, E) bf16

    out = linear(ctx, prepared["w_out"], prepared["b_out"], out_dtype=jnp.float32)
    return out.reshape(N, Sq, E)


# ---------------------------------------------------------------------------
# Deterministic parameter init (PyTorch nn.Linear-style uniform bounds)
# ---------------------------------------------------------------------------
def init_params(key, embed_dim):
    bound = 1.0 / (embed_dim ** 0.5)
    names = ["q", "k", "v", "p"]
    keys = jax.random.split(key, 2 * len(names))
    params = {}
    for i, n in enumerate(names):
        params["w" + n] = jax.random.uniform(
            keys[2 * i], (embed_dim, embed_dim), jnp.float32, -bound, bound)
        params["b" + n] = jax.random.uniform(
            keys[2 * i + 1], (embed_dim,), jnp.float32, -bound, bound)
    return params


# ---------------------------------------------------------------------------
# Pure-JAX f32 reference (mirrors the PyTorch forward)
# ---------------------------------------------------------------------------
def reference(q, k, v, params, n_heads, mask=None):
    N, Sq, E = q.shape
    Sk = k.shape[1]
    D = E // n_heads
    scale = float(E) ** 0.5

    def lin(x, w, b):
        return x @ w.T + b

    Q = lin(q, params["wq"], params["bq"]).reshape(N, Sq, n_heads, D).transpose(0, 2, 1, 3)
    K = lin(k, params["wk"], params["bk"]).reshape(N, Sk, n_heads, D).transpose(0, 2, 1, 3)
    V = lin(v, params["wv"], params["bv"]).reshape(N, Sk, n_heads, D).transpose(0, 2, 1, 3)
    energy = jnp.einsum("nhqd,nhkd->nhqk", Q, K) / scale
    if mask is not None:
        m = jnp.asarray(mask)
        m = m.reshape((1,) * (4 - m.ndim) + m.shape)
        energy = jnp.where(m == 0, -1e20, energy)
    attn = jax.nn.softmax(energy, axis=-1)
    x = jnp.einsum("nhqk,nhkd->nhqd", attn, V)
    x = x.transpose(0, 2, 1, 3).reshape(N, Sq, E)
    return lin(x, params["wp"], params["bp"])


if __name__ == "__main__":
    key = jax.random.PRNGKey(0)
    TOL = dict(atol=5e-2, rtol=5e-2)   # bf16 MXU path vs f32 reference

    # ---- small shapes: batch=2, seq=8, embed_dim=32, heads=4 (D=8) ----
    N, S, E, H = 2, 8, 32, 4
    kx, kq, kkv, kp, kx2, kp2 = jax.random.split(key, 6)
    params = init_params(kp, E)
    prepared = prepare_params(params, E)
    x = jax.random.normal(kx, (N, S, E), jnp.float32)

    # 1) self-attention, no mask (fused QKV projection + maskless flash kernel)
    out = jax.block_until_ready(multi_head_attention(x, x, x, prepared, H))
    ref = reference(x, x, x, params, H)
    assert out.shape == (N, S, E), out.shape
    assert jnp.allclose(out, ref, **TOL), "mismatch: self-attn, no mask"

    # 2) in-kernel causal mask (iota mask + tile skipping) vs explicit reference
    causal_mask = jnp.tril(jnp.ones((S, S), jnp.int32)).reshape(1, 1, S, S)
    out_c = jax.block_until_ready(
        multi_head_attention(x, x, x, prepared, H, causal=True))
    ref_c = reference(x, x, x, params, H, mask=causal_mask)
    assert jnp.allclose(out_c, ref_c, **TOL), "mismatch: in-kernel causal"

    # 3) same mask streamed as an int8 HBM mask (arbitrary-mask path)
    out_m = jax.block_until_ready(
        multi_head_attention(x, x, x, prepared, H, mask=causal_mask))
    assert jnp.allclose(out_m, ref_c, **TOL), "mismatch: streamed mask"

    # 4) cross-attention (q != k, k is v, different key length) -> fused KV GEMM
    Sk = 16
    xq = jax.random.normal(kq, (N, S, E), jnp.float32)
    xkv = jax.random.normal(kkv, (N, Sk, E), jnp.float32)
    out_x = jax.block_until_ready(multi_head_attention(xq, xkv, xkv, prepared, H))
    ref_x = reference(xq, xkv, xkv, params, H)
    assert out_x.shape == (N, S, E), out_x.shape
    assert jnp.allclose(out_x, ref_x, **TOL), "mismatch: cross-attention"

    # ---- moderate shapes exercising the lane-dense head-grouped path and
    #      causal tile skipping: batch=2, seq=384, embed_dim=256, heads=4 ----
    N2, S2, E2, H2 = 2, 384, 256, 4            # D=64 -> head group G=2 (GD=128)
    params2 = init_params(kp2, E2)
    prepared2 = prepare_params(params2, E2)
    x2 = jax.random.normal(kx2, (N2, S2, E2), jnp.float32)

    out2 = jax.block_until_ready(
        multi_head_attention(x2, x2, x2, prepared2, H2, causal=True))
    causal2 = jnp.tril(jnp.ones((S2, S2), jnp.int32)).reshape(1, 1, S2, S2)
    ref2 = reference(x2, x2, x2, params2, H2, mask=causal2)
    assert jnp.allclose(out2, ref2, **TOL), "mismatch: causal (head-grouped)"

    lengths = jnp.array([300, 384], jnp.int32)
    pad_mask = (jnp.arange(S2)[None, None, None, :]
                < lengths[:, None, None, None])          # (N, 1, 1, Sk)
    out2p = jax.block_until_ready(
        multi_head_attention(x2, x2, x2, prepared2, H2, mask=pad_mask))
    ref2p = reference(x2, x2, x2, params2, H2, mask=pad_mask)
    assert jnp.allclose(out2p, ref2p, **TOL), "mismatch: padding mask"

    print("KERNEL_OK")
</pallas_src>

<mosaic_0001>
module attributes {stable_mosaic.version = 11 : i64} {
  func.func @_linear_kernel(%arg0: i32, %arg1: i32, %arg2: i32, %arg3: memref<16x32xbf16, #tpu.memory_space<vmem>>, %arg4: memref<32x96xbf16, #tpu.memory_space<vmem>>, %arg5: memref<1x96xf32, #tpu.memory_space<vmem>>, %arg6: memref<16x96xbf16, #tpu.memory_space<vmem>>, %arg7: memref<16x96xf32, #tpu.memory_space<vmem>>) attributes {dimension_semantics = [#tpu.dimension_semantics<parallel>, #tpu.dimension_semantics<parallel>, #tpu.dimension_semantics<arbitrary>], iteration_bounds = array<i64: 1, 1, 1>, scalar_prefetch = 0 : i64, scratch_operands = 1 : i64, tpu.core_type = #tpu.core_type<tc>, window_params = [{transform_indices = @transform_0, window_bounds = array<i64: 16, 32>}, {transform_indices = @transform_1, window_bounds = array<i64: 32, 96>}, {transform_indices = @transform_2, window_bounds = array<i64: 1, 96>}, {transform_indices = @transform_3, window_bounds = array<i64: 16, 96>}]} {
    %c0_i32 = arith.constant 0 : i32
    %0 = arith.cmpi eq, %arg2, %c0_i32 : i32
    %1 = arith.extui %0 : i1 to i32
    %c0_i32_0 = arith.constant 0 : i32
    %2 = arith.cmpi ne, %1, %c0_i32_0 : i32
    scf.if %2 {
      %cst_10 = arith.constant 0.000000e+00 : f32
      %12 = vector.broadcast %cst_10 : f32 to vector<16x96xf32>
      %c0_11 = arith.constant 0 : index
      %c0_12 = arith.constant 0 : index
      %13 = vector.load %arg7[%c0_11, %c0_12] : memref<16x96xf32, #tpu.memory_space<vmem>>, vector<16x96xf32>
      tpu.vector_store %arg7[%c0_11, %c0_12], %12 {strides = array<i32>} : memref<16x96xf32, #tpu.memory_space<vmem>>, vector<16x96xf32>,
    } else {
    }
    %c0 = arith.constant 0 : index
    %c0_1 = arith.constant 0 : index
    %3 = vector.load %arg7[%c0, %c0_1] : memref<16x96xf32, #tpu.memory_space<vmem>>, vector<16x96xf32>
    %c0_2 = arith.constant 0 : index
    %c0_3 = arith.constant 0 : index
    %4 = vector.load %arg3[%c0_2, %c0_3] : memref<16x32xbf16, #tpu.memory_space<vmem>>, vector<16x32xbf16>
    %c0_4 = arith.constant 0 : index
    %c0_5 = arith.constant 0 : index
    %5 = vector.load %arg4[%c0_4, %c0_5] : memref<32x96xbf16, #tpu.memory_space<vmem>>, vector<32x96xbf16>
    %cst = arith.constant dense<0.000000e+00> : vector<16x96xf32>
    %6 = tpu.matmul %4, %5, %cst {dimension_numbers = #tpu.dot_dimension_numbers<[1], [0], [0], [1], [0, 0, 1, 1], [], []>} : vector<16x32xbf16>, vector<32x96xbf16>, vector<16x96xf32> -> vector<16x96xf32>
    %7 = arith.addf %3, %6 : vector<16x96xf32>
    %c0_6 = arith.constant 0 : index
    %c0_7 = arith.constant 0 : index
    %8 = vector.load %arg7[%c0_6, %c0_7] : memref<16x96xf32, #tpu.memory_space<vmem>>, vector<16x96xf32>
    tpu.vector_store %arg7[%c0_6, %c0_7], %7 {strides = array<i32>} : memref<16x96xf32, #tpu.memory_space<vmem>>, vector<16x96xf32>,
    %c0_i32_8 = arith.constant 0 : i32
    %9 = arith.cmpi eq, %arg2, %c0_i32_8 : i32
    %10 = arith.extui %9 : i1 to i32
    %c0_i32_9 = arith.constant 0 : i32
    %11 = arith.cmpi ne, %10, %c0_i32_9 : i32
    scf.if %11 {
      %c0_10 = arith.constant 0 : index
      %c0_11 = arith.constant 0 : index
      %12 = vector.load %arg7[%c0_10, %c0_11] : memref<16x96xf32, #tpu.memory_space<vmem>>, vector<16x96xf32>
      %c0_12 = arith.constant 0 : index
      %c0_13 = arith.constant 0 : index
      %13 = vector.load %arg5[%c0_12, %c0_13] : memref<1x96xf32, #tpu.memory_space<vmem>>, vector<1x96xf32>
      %14 = vector.broadcast %13 : vector<1x96xf32> to vector<16x96xf32>
      %15 = arith.addf %12, %14 : vector<16x96xf32>
      %16 = arith.truncf %15 : vector<16x96xf32> to vector<16x96xbf16>
      %c0_14 = arith.constant 0 : index
      %c0_15 = arith.constant 0 : index
      %17 = vector.load %arg6[%c0_14, %c0_15] : memref<16x96xbf16, #tpu.memory_space<vmem>>, vector<16x96xbf16>
      tpu.vector_store %arg6[%c0_14, %c0_15], %16 {strides = array<i32>} : memref<16x96xbf16, #tpu.memory_space<vmem>>, vector<16x96xbf16>,
    } else {
    }
    return
  }
  func.func @transform_0(%arg0: i32, %arg1: i32, %arg2: i32) -> (i32, i32) {
    %c0_i32 = arith.constant 0 : i32
    return %arg0, %arg2 : i32, i32
  }
  func.func @transform_1(%arg0: i32, %arg1: i32, %arg2: i32) -> (i32, i32) {
    %c0_i32 = arith.constant 0 : i32
    return %arg2, %arg1 : i32, i32
  }
  func.func @transform_2(%arg0: i32, %arg1: i32, %arg2: i32) -> (i32, i32) {
    %c0_i32 = arith.constant 0 : i32
    %c0_i32_0 = arith.constant 0 : i32
    return %c0_i32, %arg1 : i32, i32
  }
  func.func @transform_3(%arg0: i32, %arg1: i32, %arg2: i32) -> (i32, i32) {
    %c0_i32 = arith.constant 0 : i32
    return %arg0, %arg1 : i32, i32
  }
}

</mosaic_0001>

<llo_original>
// kernel: tpu_custom_call.1
$region0: #{tpu_custom_call.1}
  #allocation0 [shape = 'u32[]', space=smem, size = 0x4, offset = 0x4, fixed_abs, tag = 'smem constant byte address 0x4 - core index']
  #allocation1 [shape = 'u32[72,128]{1,0:T(1,128)}', space=vmem, size = 0x9000, scoped, tag = 'internal scratch']
  #allocation2 [shape = 'f32[16,96]{1,0:T(8,128)}', space=vmem, size = 0x2000, scoped, tag = 'scratch operand']
  %s0 = inlined_call_operand.hbm [shape: bf16[16,32], index: 0, kind: input, shape index: {}]
  %s1 = inlined_call_operand.hbm [shape: bf16[32,96], index: 1, kind: input, shape index: {}]
  %s2 = inlined_call_operand.vmem [shape: f32[1,96], index: 2, kind: input, shape index: {}]
  %s3 = inlined_call_operand.hbm [shape: bf16[16,96], index: 3, kind: output, shape index: {}]
  %s4 = sld [smem:[#allocation0]]
  $region38: #{tpu_custom_call.1} parent=0
    _
  %s6 = ssub.s32 1, %s4
  %s7 = scalar_select 0, %s6, %s4
  $region1: #{tpu_custom_call.1} parent=0
    #allocation3 [shape = 'u8[4096]{0}', space=vmem, size = 0x1000, scoped, tag = 'input window, operand 0, single buffered']
    #allocation4 [shape = 's32[1]{0}', space=sflag, size = 0x4, scoped, tag = 'scoped memory for tpu_custom_call.1']
    #allocation5 [shape = 's32[1]{0}', space=sflag, size = 0x4, scoped, tag = 'scoped memory for tpu_custom_call.1']
    #allocation6 [shape = 'u8[8192]{0}', space=vmem, size = 0x2000, scoped, tag = 'input window, operand 1, single buffered']
    #allocation7 [shape = 's32[1]{0}', space=sflag, size = 0x4, scoped, tag = 'scoped memory for tpu_custom_call.1']
    #allocation8 [shape = 'u8[4096]{0}', space=vmem, size = 0x1000, scoped, tag = 'output window, operand 0, single buffered']
    %8 = vsyncpa [#allocation4], 0
    %9 = vsyncpa [#allocation7], 0
    %10 = vsyncpa [#allocation5], 0
    // Predicated region
    $region2: #{tpu_custom_call.1} parent=1 // pred_check
      _
    $region3: #{tpu_custom_call.1} parent=1 // pred_check_branch
      %12 = sbr.rel (0) target = $region5
    $region4: #{tpu_custom_call.1} parent=1 // pred_region
      %14 = vsyncadd [#allocation4], 0
      %s15 = sshll.u32 %s0, 4
      %s16 = int_to_ptr.hbm [resolvable:$true] %s15
      %s17 = sshll.u32 [#allocation3], 4
      %s18 = int_to_ptr.vmem [resolvable:$true] %s17
      %23 = dma.hbm_to_vmem [thread:$0]  %s16, 128, %s18, [#allocation4], 64, 64, 4
    $region5: #{tpu_custom_call.1} parent=1 // pred_fallthru
      _
    // Predicated region
    $region6: #{tpu_custom_call.1} parent=1 // pred_check
      _
    $region7: #{tpu_custom_call.1} parent=1 // pred_check_branch
      %25 = sbr.rel (0) target = $region9
    $region8: #{tpu_custom_call.1} parent=1 // pred_region
      %27 = vsyncadd [#allocation7], 0
      %s28 = sshll.u32 %s1, 4
      %s29 = int_to_ptr.hbm [resolvable:$true] %s28
      %s30 = sshll.u32 [#allocation6], 4
      %s31 = int_to_ptr.vmem [resolvable:$true] %s30
      %36 = dma.hbm_to_vmem [thread:$0]  %s29, 256, %s31, [#allocation7], 64, 64, 4
    $region9: #{tpu_custom_call.1} parent=1 // pred_fallthru
      _
    // Predicated region
    $region10: #{tpu_custom_call.1} parent=1 // pred_check
      _
    $region11: #{tpu_custom_call.1} parent=1 // pred_check_branch
      %38 = sbr.rel (0) target = $region13
    $region12: #{tpu_custom_call.1} parent=1 // pred_region
      _
    $region13: #{tpu_custom_call.1} parent=1 // pred_fallthru
      _
    // Predicated region
    $region14: #{tpu_custom_call.1} parent=1 // pred_check
      _
    $region15: #{tpu_custom_call.1} parent=1 // pred_check_branch
      %40 = sbr.rel (0) target = $region17
    $region16: #{tpu_custom_call.1} parent=1 // pred_region
      %42 = dma.done [#allocation4], 128
    $region17: #{tpu_custom_call.1} parent=1 // pred_fallthru
      _
    // Predicated region
    $region18: #{tpu_custom_call.1} parent=1 // pred_check
      _
    $region19: #{tpu_custom_call.1} parent=1 // pred_check_branch
      %44 = sbr.rel (0) target = $region21
    $region20: #{tpu_custom_call.1} parent=1 // pred_region
      %46 = dma.done [#allocation7], 256
    $region21: #{tpu_custom_call.1} parent=1 // pred_fallthru
      _
    %p48 = scmp.eq.s32.totalorder 0, 0
    // Predicated region
    $region22: #{tpu_custom_call.1} parent=1 // pred_check
      %p49 = pneg %p48
    $region23: #{tpu_custom_call.1} parent=1 // pred_check_branch
      %51 = sbr.rel (%p49) target = $region25
    $region24: #{tpu_custom_call.1} parent=1 // pred_region
      %vm52 = vcmask 785408
      %53 = vst.msk [vmem:[#allocation2] sm:$0xff] %vm52, 0.0
      %54 = vst.msk [vmem:[#allocation2 + $0x8] sm:$0xff] %vm52, 0.0
    $region25: #{tpu_custom_call.1} parent=1 // pred_fallthru
      _
    %v55 = vld [vmem:[#allocation2] sm:$0xff]
    %v56 = vld [vmem:[#allocation2 + $0x8] sm:$0xff]
    %v57 = vld [vmem:[#allocation3] sm:$0xf]
    %v58 = vld [vmem:[#allocation3 + $0x4] sm:$0xf]
    %v59 = vld [vmem:[#allocation6] sm:$0xf]
    %v60 = vld [vmem:[#allocation6 + $0x4] sm:$0xf]
    %v61 = vld [vmem:[#allocation6 + $0x8] sm:$0xf]
    %v62 = vld [vmem:[#allocation6 + $0xc] sm:$0xf]
    %v65 = vunpack.c.l.b16 %v57
    %v66 = vunpack.c.l.b16 %v58
    %v67 = vpack.c.b16 %v66, %v65
    %v72 = vunpack.c.l.b16 %v59
    %v73 = vunpack.c.l.b16 %v60
    %v74 = vunpack.c.l.b16 %v61
    %v75 = vunpack.c.l.b16 %v62
    %v76 = vpack.c.b16 %v73, %v72
    %v77 = vpack.c.b16 %v75, %v74
    %vm80 = vcmask 261120
    %v82 = vsel %vm80, %v67, 0
    %84 = vmatpush.bf16.msra.mxu0 0
    %85 = vmatpush.bf16.msra.mxu0 0
    %86 = vmatpush.bf16.msra.mxu0 0
    %87 = vmatpush.bf16.msra.mxu0 0
    %88 = vmatpush.bf16.msra.mxu0 0
    %89 = vmatpush.bf16.msra.mxu0 0
    %90 = vmatpush.bf16.msra.mxu0 %v77
    %91 = vmatpush.bf16.msra.mxu0 %v76
    %92 = vmatmul.bf16.gmra.mxu0 %v82
    %v93 = vpop.f32.mrf.mxu0
    %v94 = vadd.f32 0.0, %v93
    %v95 = vpop.f32.mrf.mxu0
    %v96 = vadd.f32 0.0, %v95
    %97 = vdwg.mxu0
    %v98 = vadd.f32 %v55, %v94
    %v99 = vadd.f32 %v56, %v96
    %vm100 = vcmask 785408
    %101 = vst.msk [vmem:[#allocation2] sm:$0xff] %vm100, %v98
    %102 = vst.msk [vmem:[#allocation2 + $0x8] sm:$0xff] %vm100, %v99
    // Predicated region
    $region26: #{tpu_custom_call.1} parent=1 // pred_check
      %p103 = pneg %p48
    $region27: #{tpu_custom_call.1} parent=1 // pred_check_branch
      %105 = sbr.rel (%p103) target = $region29
    $region28: #{tpu_custom_call.1} parent=1 // pred_region
      %v106 = vld [vmem:[#allocation2] sm:$0xff]
      %v107 = vld [vmem:[#allocation2 + $0x8] sm:$0xff]
      %v108 = vld [vmem:[%s2] sm:$0x1]
      %v110 = vperm.slane %v108, 0
      %v112 = vadd.f32 %v106, %v110
      %v113 = vadd.f32 %v107, %v110
      %v114 = vpack.c.bf16 %v112, %v112
      %v115 = vpack.c.bf16 %v113, %v113
      %vm116 = vcmask 781312
      %117 = vst.msk [vmem:[#allocation8] sm:$0xf] %vm116, %v114
      %118 = vst.msk [vmem:[#allocation8 + $0x4] sm:$0xf] %vm116, %v115
    $region29: #{tpu_custom_call.1} parent=1 // pred_fallthru
      _
    // Predicated region
    $region30: #{tpu_custom_call.1} parent=1 // pred_check
      _
    $region31: #{tpu_custom_call.1} parent=1 // pred_check_branch
      %120 = sbr.rel (0) target = $region33
    $region32: #{tpu_custom_call.1} parent=1 // pred_region
      %122 = vsyncadd [#allocation5], 0
      %s123 = sshll.u32 [#allocation8], 4
      %s124 = int_to_ptr.vmem [resolvable:$true] %s123
      %s125 = sshll.u32 %s3, 4
      %s126 = int_to_ptr.hbm [resolvable:$true] %s125
      %131 = dma.vmem_to_hbm [thread:$0]  %s124, 128, %s126, [#allocation5], 64, 64, 4
    $region33: #{tpu_custom_call.1} parent=1 // pred_fallthru
      _
    // Predicated region
    $region34: #{tpu_custom_call.1} parent=1 // pred_check
      _
    $region35: #{tpu_custom_call.1} parent=1 // pred_check_branch
      %133 = sbr.rel (0) target = $region37
    $region36: #{tpu_custom_call.1} parent=1 // pred_region
      %135 = dma.done [#allocation5], 128
    $region37: #{tpu_custom_call.1} parent=1 // pred_fallthru
      _
    %136 = vsyncpa [#allocation4], 1
    %137 = vsyncpa [#allocation7], 1
    %138 = vsyncpa [#allocation5], 1

</llo_original>
